<compile_context>
chip_gen: v7x
topology: tpu7x:2x2x1
jax: 0.10.0
libtpu: 0.0.40
codegen_flags: <defaults>
</compile_context>

<pallas_src>
import functools
import math

import jax
import jax.numpy as jnp
from jax.experimental import pallas as pl
from jax.experimental.pallas import tpu as pltpu

BN_EPS = 1e-5
LANE = 128
MXU_DTYPE = jnp.bfloat16   # bf16 inputs to the MXU, f32 accumulate.


def _round_up(n, m):
    return ((n + m - 1) // m) * m


# ----------------------------- Fused Pallas kernel -----------------------------

def _fused_mlp_kernel(*refs, n_layers):
    """refs = (x, W_1, b_1, ..., W_L, b_L, out).

    Hidden layers: Linear -> BatchNorm1d(training, gamma=1, beta=0) -> ReLU.
    Last layer:    Linear only.
    All matmuls on the MXU in bf16 with f32 accumulation; BN/ReLU in f32.
    """
    x_ref = refs[0]
    out_ref = refs[-1]

    h = x_ref[...]                                    # bf16 (B, Din_pad)
    for l in range(n_layers):
        w = refs[1 + 2 * l][...]                      # bf16 (Din_pad, Dout_pad)
        b = refs[2 + 2 * l][...]                      # f32  (1, Dout_pad)
        y = jnp.dot(h, w, preferred_element_type=jnp.float32) + b
        if l < n_layers - 1:
            # BatchNorm1d training mode: per-feature batch mean, biased var.
            mean = jnp.mean(y, axis=0, keepdims=True)
            diff = y - mean
            var = jnp.mean(diff * diff, axis=0, keepdims=True)
            y = jnp.maximum(diff * jax.lax.rsqrt(var + BN_EPS), 0.0)  # EUP rsqrt
            h = y.astype(MXU_DTYPE)
        else:
            out_ref[...] = y                          # lane-dense f32 store


# ------------------------------ Parameter init ------------------------------

def _orthogonal(key, shape):
    """Orthogonal init, like nn.init.orthogonal_ on a (out, in) weight."""
    return jax.nn.initializers.orthogonal()(key, shape, jnp.float32)


def init_mlpnet_params(key, dim_inp, nhiddens, dim_out):
    """Returns list of (W_t, b) per layer. W_t is (in, out) f32, b is (1, out) f32."""
    dims = [dim_inp] + list(nhiddens) + [dim_out]
    params = []
    for l in range(len(dims) - 1):
        din, dout = dims[l], dims[l + 1]
        key, kw, kb = jax.random.split(key, 3)
        w = _orthogonal(kw, (dout, din))              # PyTorch layout (out, in)
        w_t = jnp.asarray(w.T, jnp.float32)           # store transposed (in, out)
        bound = 1.0 / math.sqrt(din)
        b = jax.random.uniform(kb, (1, dout), jnp.float32, -bound, bound)
        params.append((w_t, b))
    return params


def prepare_padded_params(params):
    """One-time padding of weights/biases to lane-multiples + bf16 cast.

    Done outside the per-call forward so the steady-state forward does not
    re-pad / re-cast parameters every invocation.
    """
    dim_in = params[0][0].shape[0]
    cur_in = _round_up(dim_in, LANE)
    padded = []
    for (w_t, b) in params:
        din, dout = w_t.shape
        dout_pad = _round_up(dout, LANE)
        w_p = jnp.pad(
            w_t, ((0, cur_in - din), (0, dout_pad - dout))
        ).astype(MXU_DTYPE)
        b_p = jnp.pad(b, ((0, 0), (0, dout_pad - dout))).astype(jnp.float32)
        padded.append((w_p, b_p))
        cur_in = dout_pad
    return padded


# ------------------------------ Forward (Pallas) ----------------------------

@functools.partial(jax.jit, static_argnames=("dim_in", "dim_out"))
def mlpnet_forward(padded_params, x, *, dim_in, dim_out):
    """MLPNet forward as a single fused Pallas kernel.

    `padded_params` come from prepare_padded_params (already lane-padded bf16
    weights / f32 biases).  Pads the input feature dim, runs the fused
    Linear(+BN+ReLU) chain in one pallas_call, slices the real outputs out.
    """
    n_layers = len(padded_params)
    batch = x.shape[0]
    din_pad = padded_params[0][0].shape[0]
    out_pad = padded_params[-1][0].shape[1]

    # Pad input feature dim (zero columns) and cast to bf16 for the MXU.
    x_p = jnp.pad(x, ((0, 0), (0, din_pad - dim_in))).astype(MXU_DTYPE)

    args = [x_p]
    for (w_p, b_p) in padded_params:
        args += [w_p, b_p]

    vmem = pltpu.MemorySpace.VMEM
    out_p = pl.pallas_call(
        functools.partial(_fused_mlp_kernel, n_layers=n_layers),
        out_shape=jax.ShapeDtypeStruct((batch, out_pad), jnp.float32),
        in_specs=[pl.BlockSpec(memory_space=vmem)] * len(args),
        out_specs=pl.BlockSpec(memory_space=vmem),
        compiler_params=pltpu.CompilerParams(vmem_limit_bytes=64 << 20),
    )(*args)

    return out_p[:, :dim_out]


# ------------------------------ Reference (JAX) ------------------------------

def mlpnet_reference(params, x):
    """Pure-JAX reference mirroring the kernel's bf16-on-MXU / f32-accumulate."""
    h = x
    n = len(params)
    for i, (w_t, b) in enumerate(params):
        y = jnp.dot(
            h.astype(MXU_DTYPE), w_t.astype(MXU_DTYPE),
            preferred_element_type=jnp.float32,
        ) + b
        if i < n - 1:
            mean = jnp.mean(y, axis=0, keepdims=True)
            var = jnp.mean((y - mean) ** 2, axis=0, keepdims=True)
            h = jnp.maximum((y - mean) * jax.lax.rsqrt(var + BN_EPS), 0.0)
        else:
            h = y
    return h


# ----------------------------------- Main ------------------------------------

if __name__ == "__main__":
    # Small shapes consistent with the module: 2-D input (batch, dim_inp).
    batch = 128
    dim_inp = 32
    nhiddens = [32, 32, 32]
    dim_out = 10

    key = jax.random.PRNGKey(0)
    key, kx = jax.random.split(key)
    x = jax.random.normal(kx, (batch, dim_inp), jnp.float32)

    params = init_mlpnet_params(key, dim_inp, nhiddens, dim_out)
    padded_params = prepare_padded_params(params)

    out = mlpnet_forward(padded_params, x, dim_in=dim_inp, dim_out=dim_out)
    out = jax.block_until_ready(out)

    ref = mlpnet_reference(params, x)
    assert out.shape == (batch, dim_out), out.shape
    err = float(jnp.max(jnp.abs(out - ref)))
    assert jnp.allclose(out, ref, rtol=1e-3, atol=1e-3), err
    print("KERNEL_OK")
</pallas_src>

<mosaic_0001>
module attributes {stable_mosaic.version = 11 : i64} {
  func.func @_fused_mlp_kernel(%arg0: memref<128x128xbf16, #tpu.memory_space<vmem>>, %arg1: memref<128x128xbf16, #tpu.memory_space<vmem>>, %arg2: memref<1x128xf32, #tpu.memory_space<vmem>>, %arg3: memref<128x128xbf16, #tpu.memory_space<vmem>>, %arg4: memref<1x128xf32, #tpu.memory_space<vmem>>, %arg5: memref<128x128xbf16, #tpu.memory_space<vmem>>, %arg6: memref<1x128xf32, #tpu.memory_space<vmem>>, %arg7: memref<128x128xbf16, #tpu.memory_space<vmem>>, %arg8: memref<1x128xf32, #tpu.memory_space<vmem>>, %arg9: memref<128x128xf32, #tpu.memory_space<vmem>>) attributes {dimension_semantics = [], scalar_prefetch = 0 : i64, scratch_operands = 0 : i64, tpu.core_type = #tpu.core_type<tc>} {
    %c0 = arith.constant 0 : index
    %c0_0 = arith.constant 0 : index
    %0 = vector.load %arg0[%c0, %c0_0] : memref<128x128xbf16, #tpu.memory_space<vmem>>, vector<128x128xbf16>
    %c0_1 = arith.constant 0 : index
    %c0_2 = arith.constant 0 : index
    %1 = vector.load %arg1[%c0_1, %c0_2] : memref<128x128xbf16, #tpu.memory_space<vmem>>, vector<128x128xbf16>
    %c0_3 = arith.constant 0 : index
    %c0_4 = arith.constant 0 : index
    %2 = vector.load %arg2[%c0_3, %c0_4] : memref<1x128xf32, #tpu.memory_space<vmem>>, vector<1x128xf32>
    %cst = arith.constant dense<0.000000e+00> : vector<128x128xf32>
    %3 = tpu.matmul %0, %1, %cst {dimension_numbers = #tpu.dot_dimension_numbers<[1], [0], [0], [1], [0, 0, 1, 1], [], []>} : vector<128x128xbf16>, vector<128x128xbf16>, vector<128x128xf32> -> vector<128x128xf32>
    %4 = vector.broadcast %2 : vector<1x128xf32> to vector<128x128xf32>
    %5 = arith.addf %3, %4 : vector<128x128xf32>
    %cst_5 = arith.constant dense<0.000000e+00> : vector<128xf32>
    %6 = vector.multi_reduction <add>, %5, %cst_5 [0] : vector<128x128xf32> to vector<128xf32>
    %7 = vector.shape_cast %6 : vector<128xf32> to vector<1x128xf32>
    %cst_6 = arith.constant 1.280000e+02 : f32
    %8 = vector.broadcast %cst_6 : f32 to vector<1x128xf32>
    %9 = arith.divf %7, %8 : vector<1x128xf32>
    %10 = vector.broadcast %9 : vector<1x128xf32> to vector<128x128xf32>
    %11 = arith.subf %5, %10 : vector<128x128xf32>
    %12 = arith.mulf %11, %11 : vector<128x128xf32>
    %cst_7 = arith.constant dense<0.000000e+00> : vector<128xf32>
    %13 = vector.multi_reduction <add>, %12, %cst_7 [0] : vector<128x128xf32> to vector<128xf32>
    %14 = vector.shape_cast %13 : vector<128xf32> to vector<1x128xf32>
    %cst_8 = arith.constant 1.280000e+02 : f32
    %15 = vector.broadcast %cst_8 : f32 to vector<1x128xf32>
    %16 = arith.divf %14, %15 : vector<1x128xf32>
    %cst_9 = arith.constant 9.99999974E-6 : f32
    %17 = vector.broadcast %cst_9 : f32 to vector<1x128xf32>
    %18 = arith.addf %16, %17 : vector<1x128xf32>
    %19 = math.rsqrt %18 : vector<1x128xf32>
    %20 = vector.broadcast %19 : vector<1x128xf32> to vector<128x128xf32>
    %21 = arith.mulf %11, %20 : vector<128x128xf32>
    %cst_10 = arith.constant 0.000000e+00 : f32
    %22 = vector.broadcast %cst_10 : f32 to vector<128x128xf32>
    %23 = arith.maximumf %21, %22 : vector<128x128xf32>
    %24 = arith.truncf %23 : vector<128x128xf32> to vector<128x128xbf16>
    %c0_11 = arith.constant 0 : index
    %c0_12 = arith.constant 0 : index
    %25 = vector.load %arg3[%c0_11, %c0_12] : memref<128x128xbf16, #tpu.memory_space<vmem>>, vector<128x128xbf16>
    %c0_13 = arith.constant 0 : index
    %c0_14 = arith.constant 0 : index
    %26 = vector.load %arg4[%c0_13, %c0_14] : memref<1x128xf32, #tpu.memory_space<vmem>>, vector<1x128xf32>
    %cst_15 = arith.constant dense<0.000000e+00> : vector<128x128xf32>
    %27 = tpu.matmul %24, %25, %cst_15 {dimension_numbers = #tpu.dot_dimension_numbers<[1], [0], [0], [1], [0, 0, 1, 1], [], []>} : vector<128x128xbf16>, vector<128x128xbf16>, vector<128x128xf32> -> vector<128x128xf32>
    %28 = vector.broadcast %26 : vector<1x128xf32> to vector<128x128xf32>
    %29 = arith.addf %27, %28 : vector<128x128xf32>
    %cst_16 = arith.constant dense<0.000000e+00> : vector<128xf32>
    %30 = vector.multi_reduction <add>, %29, %cst_16 [0] : vector<128x128xf32> to vector<128xf32>
    %31 = vector.shape_cast %30 : vector<128xf32> to vector<1x128xf32>
    %cst_17 = arith.constant 1.280000e+02 : f32
    %32 = vector.broadcast %cst_17 : f32 to vector<1x128xf32>
    %33 = arith.divf %31, %32 : vector<1x128xf32>
    %34 = vector.broadcast %33 : vector<1x128xf32> to vector<128x128xf32>
    %35 = arith.subf %29, %34 : vector<128x128xf32>
    %36 = arith.mulf %35, %35 : vector<128x128xf32>
    %cst_18 = arith.constant dense<0.000000e+00> : vector<128xf32>
    %37 = vector.multi_reduction <add>, %36, %cst_18 [0] : vector<128x128xf32> to vector<128xf32>
    %38 = vector.shape_cast %37 : vector<128xf32> to vector<1x128xf32>
    %cst_19 = arith.constant 1.280000e+02 : f32
    %39 = vector.broadcast %cst_19 : f32 to vector<1x128xf32>
    %40 = arith.divf %38, %39 : vector<1x128xf32>
    %cst_20 = arith.constant 9.99999974E-6 : f32
    %41 = vector.broadcast %cst_20 : f32 to vector<1x128xf32>
    %42 = arith.addf %40, %41 : vector<1x128xf32>
    %43 = math.rsqrt %42 : vector<1x128xf32>
    %44 = vector.broadcast %43 : vector<1x128xf32> to vector<128x128xf32>
    %45 = arith.mulf %35, %44 : vector<128x128xf32>
    %cst_21 = arith.constant 0.000000e+00 : f32
    %46 = vector.broadcast %cst_21 : f32 to vector<128x128xf32>
    %47 = arith.maximumf %45, %46 : vector<128x128xf32>
    %48 = arith.truncf %47 : vector<128x128xf32> to vector<128x128xbf16>
    %c0_22 = arith.constant 0 : index
    %c0_23 = arith.constant 0 : index
    %49 = vector.load %arg5[%c0_22, %c0_23] : memref<128x128xbf16, #tpu.memory_space<vmem>>, vector<128x128xbf16>
    %c0_24 = arith.constant 0 : index
    %c0_25 = arith.constant 0 : index
    %50 = vector.load %arg6[%c0_24, %c0_25] : memref<1x128xf32, #tpu.memory_space<vmem>>, vector<1x128xf32>
    %cst_26 = arith.constant dense<0.000000e+00> : vector<128x128xf32>
    %51 = tpu.matmul %48, %49, %cst_26 {dimension_numbers = #tpu.dot_dimension_numbers<[1], [0], [0], [1], [0, 0, 1, 1], [], []>} : vector<128x128xbf16>, vector<128x128xbf16>, vector<128x128xf32> -> vector<128x128xf32>
    %52 = vector.broadcast %50 : vector<1x128xf32> to vector<128x128xf32>
    %53 = arith.addf %51, %52 : vector<128x128xf32>
    %cst_27 = arith.constant dense<0.000000e+00> : vector<128xf32>
    %54 = vector.multi_reduction <add>, %53, %cst_27 [0] : vector<128x128xf32> to vector<128xf32>
    %55 = vector.shape_cast %54 : vector<128xf32> to vector<1x128xf32>
    %cst_28 = arith.constant 1.280000e+02 : f32
    %56 = vector.broadcast %cst_28 : f32 to vector<1x128xf32>
    %57 = arith.divf %55, %56 : vector<1x128xf32>
    %58 = vector.broadcast %57 : vector<1x128xf32> to vector<128x128xf32>
    %59 = arith.subf %53, %58 : vector<128x128xf32>
    %60 = arith.mulf %59, %59 : vector<128x128xf32>
    %cst_29 = arith.constant dense<0.000000e+00> : vector<128xf32>
    %61 = vector.multi_reduction <add>, %60, %cst_29 [0] : vector<128x128xf32> to vector<128xf32>
    %62 = vector.shape_cast %61 : vector<128xf32> to vector<1x128xf32>
    %cst_30 = arith.constant 1.280000e+02 : f32
    %63 = vector.broadcast %cst_30 : f32 to vector<1x128xf32>
    %64 = arith.divf %62, %63 : vector<1x128xf32>
    %cst_31 = arith.constant 9.99999974E-6 : f32
    %65 = vector.broadcast %cst_31 : f32 to vector<1x128xf32>
    %66 = arith.addf %64, %65 : vector<1x128xf32>
    %67 = math.rsqrt %66 : vector<1x128xf32>
    %68 = vector.broadcast %67 : vector<1x128xf32> to vector<128x128xf32>
    %69 = arith.mulf %59, %68 : vector<128x128xf32>
    %cst_32 = arith.constant 0.000000e+00 : f32
    %70 = vector.broadcast %cst_32 : f32 to vector<128x128xf32>
    %71 = arith.maximumf %69, %70 : vector<128x128xf32>
    %72 = arith.truncf %71 : vector<128x128xf32> to vector<128x128xbf16>
    %c0_33 = arith.constant 0 : index
    %c0_34 = arith.constant 0 : index
    %73 = vector.load %arg7[%c0_33, %c0_34] : memref<128x128xbf16, #tpu.memory_space<vmem>>, vector<128x128xbf16>
    %c0_35 = arith.constant 0 : index
    %c0_36 = arith.constant 0 : index
    %74 = vector.load %arg8[%c0_35, %c0_36] : memref<1x128xf32, #tpu.memory_space<vmem>>, vector<1x128xf32>
    %cst_37 = arith.constant dense<0.000000e+00> : vector<128x128xf32>
    %75 = tpu.matmul %72, %73, %cst_37 {dimension_numbers = #tpu.dot_dimension_numbers<[1], [0], [0], [1], [0, 0, 1, 1], [], []>} : vector<128x128xbf16>, vector<128x128xbf16>, vector<128x128xf32> -> vector<128x128xf32>
    %76 = vector.broadcast %74 : vector<1x128xf32> to vector<128x128xf32>
    %77 = arith.addf %75, %76 : vector<128x128xf32>
    %c0_38 = arith.constant 0 : index
    %c0_39 = arith.constant 0 : index
    %78 = vector.load %arg9[%c0_38, %c0_39] : memref<128x128xf32, #tpu.memory_space<vmem>>, vector<128x128xf32>
    tpu.vector_store %arg9[%c0_38, %c0_39], %77 {strides = array<i32>} : memref<128x128xf32, #tpu.memory_space<vmem>>, vector<128x128xf32>,
    return
  }
}

</mosaic_0001>

<llo_original>
// kernel: mlpnet_forward.1
$region0: #{mlpnet_forward.1}
  #allocation0 [shape = 'u32[]', space=smem, size = 0x4, offset = 0x4, fixed_abs, tag = 'smem constant byte address 0x4 - core index']
  #allocation1 [shape = 'u32[144,128]{1,0:T(1,128)}', space=vmem, size = 0x12000, scoped, tag = 'internal scratch']
  %s0 = inlined_call_operand.hbm [shape: bf16[128,128], index: 0, kind: input, shape index: {}]
  %s1 = inlined_call_operand.hbm [shape: bf16[128,128], index: 1, kind: input, shape index: {}]
  %s2 = inlined_call_operand.hbm [shape: f32[1,128], index: 2, kind: input, shape index: {}]
  %s3 = inlined_call_operand.hbm [shape: bf16[128,128], index: 3, kind: input, shape index: {}]
  %s4 = inlined_call_operand.hbm [shape: f32[1,128], index: 4, kind: input, shape index: {}]
  %s5 = inlined_call_operand.hbm [shape: bf16[128,128], index: 5, kind: input, shape index: {}]
  %s6 = inlined_call_operand.hbm [shape: f32[1,128], index: 6, kind: input, shape index: {}]
  %s7 = inlined_call_operand.hbm [shape: bf16[128,128], index: 7, kind: input, shape index: {}]
  %s8 = inlined_call_operand.hbm [shape: f32[1,128], index: 8, kind: input, shape index: {}]
  %s9 = inlined_call_operand.hbm [shape: f32[128,128], index: 9, kind: output, shape index: {}]
  %s10 = sld [smem:[#allocation0]]
  $region82: #{mlpnet_forward.1} parent=0
    _
  %s12 = ssub.s32 1, %s10
  %s13 = scalar_select 0, %s12, %s10
  $region1: #{mlpnet_forward.1} parent=0
    #allocation2 [shape = 'u8[32768]{0}', space=vmem, size = 0x8000, scoped, tag = 'input window, operand 0, single buffered']
    #allocation3 [shape = 's32[1]{0}', space=sflag, size = 0x4, scoped, tag = 'scoped memory for mlpnet_forward.1']
    #allocation4 [shape = 's32[1]{0}', space=sflag, size = 0x4, scoped, tag = 'scoped memory for mlpnet_forward.1']
    #allocation5 [shape = 'u8[32768]{0}', space=vmem, size = 0x8000, scoped, tag = 'input window, operand 1, single buffered']
    #allocation6 [shape = 's32[1]{0}', space=sflag, size = 0x4, scoped, tag = 'scoped memory for mlpnet_forward.1']
    #allocation7 [shape = 'u8[512]{0}', space=vmem, size = 0x400, scoped, tag = 'input window, operand 2, single buffered']
    #allocation8 [shape = 'u8[32768]{0}', space=vmem, size = 0x8000, scoped, tag = 'input window, operand 3, single buffered']
    #allocation9 [shape = 's32[1]{0}', space=sflag, size = 0x4, scoped, tag = 'scoped memory for mlpnet_forward.1']
    #allocation10 [shape = 'u8[512]{0}', space=vmem, size = 0x400, scoped, tag = 'input window, operand 4, single buffered']
    #allocation11 [shape = 'u8[32768]{0}', space=vmem, size = 0x8000, scoped, tag = 'input window, operand 5, single buffered']
    #allocation12 [shape = 's32[1]{0}', space=sflag, size = 0x4, scoped, tag = 'scoped memory for mlpnet_forward.1']
    #allocation13 [shape = 'u8[512]{0}', space=vmem, size = 0x400, scoped, tag = 'input window, operand 6, single buffered']
    #allocation14 [shape = 'u8[32768]{0}', space=vmem, size = 0x8000, scoped, tag = 'input window, operand 7, single buffered']
    #allocation15 [shape = 's32[1]{0}', space=sflag, size = 0x4, scoped, tag = 'scoped memory for mlpnet_forward.1']
    #allocation16 [shape = 'u8[512]{0}', space=vmem, size = 0x400, scoped, tag = 'input window, operand 8, single buffered']
    #allocation17 [shape = 'u8[65536]{0}', space=vmem, size = 0x10000, scoped, tag = 'output window, operand 0, single buffered']
    %14 = vsyncpa [#allocation3], 0
    %15 = vsyncpa [#allocation6], 0
    %16 = vsyncpa [#allocation9], 0
    %17 = vsyncpa [#allocation12], 0
    %18 = vsyncpa [#allocation15], 0
    %19 = vsyncpa [#allocation4], 0
    // Predicated region
    $region2: #{mlpnet_forward.1} parent=1 // pred_check
      _
    $region3: #{mlpnet_forward.1} parent=1 // pred_check_branch
      %21 = sbr.rel (0) target = $region5
    $region4: #{mlpnet_forward.1} parent=1 // pred_region
      %s23 = ssub.s32 1024, 1024
      %24 = vsyncadd [#allocation3], %s23
      %s25 = sshll.u32 [#allocation2], 4
      %s26 = int_to_ptr.vmem [resolvable:$true] %s25
      %31 = dma.hbm_to_vmem [thread:$0]  %s0, 1024, %s26, [#allocation3], 64, 64, 4
    $region5: #{mlpnet_forward.1} parent=1 // pred_fallthru
      _
    // Predicated region
    $region6: #{mlpnet_forward.1} parent=1 // pred_check
      _
    $region7: #{mlpnet_forward.1} parent=1 // pred_check_branch
      %33 = sbr.rel (0) target = $region9
    $region8: #{mlpnet_forward.1} parent=1 // pred_region
      %s35 = ssub.s32 1024, 1024
      %36 = vsyncadd [#allocation6], %s35
      %s37 = sshll.u32 [#allocation5], 4
      %s38 = int_to_ptr.vmem [resolvable:$true] %s37
      %43 = dma.hbm_to_vmem [thread:$0]  %s1, 1024, %s38, [#allocation6], 64, 64, 4
    $region9: #{mlpnet_forward.1} parent=1 // pred_fallthru
      _
    // Predicated region
    $region10: #{mlpnet_forward.1} parent=1 // pred_check
      _
    $region11: #{mlpnet_forward.1} parent=1 // pred_check_branch
      %45 = sbr.rel (0) target = $region13
    $region12: #{mlpnet_forward.1} parent=1 // pred_region
      %s47 = ssub.s32 16, 16
      %48 = vsyncadd [#allocation6], %s47
      %s50 = sshll.u32 [#allocation7], 4
      %s51 = int_to_ptr.vmem [resolvable:$true] %s50
      %53 = dma.hbm_to_vmem [thread:$0]  %s2, 16, %s51, [#allocation6]
    $region13: #{mlpnet_forward.1} parent=1 // pred_fallthru
      _
    // Predicated region
    $region14: #{mlpnet_forward.1} parent=1 // pred_check
      _
    $region15: #{mlpnet_forward.1} parent=1 // pred_check_branch
      %55 = sbr.rel (0) target = $region17
    $region16: #{mlpnet_forward.1} parent=1 // pred_region
      %s57 = ssub.s32 1024, 1024
      %58 = vsyncadd [#allocation9], %s57
      %s59 = sshll.u32 [#allocation8], 4
      %s60 = int_to_ptr.vmem [resolvable:$true] %s59
      %65 = dma.hbm_to_vmem [thread:$0]  %s3, 1024, %s60, [#allocation9], 64, 64, 4
    $region17: #{mlpnet_forward.1} parent=1 // pred_fallthru
      _
    // Predicated region
    $region18: #{mlpnet_forward.1} parent=1 // pred_check
      _
    $region19: #{mlpnet_forward.1} parent=1 // pred_check_branch
      %67 = sbr.rel (0) target = $region21
    $region20: #{mlpnet_forward.1} parent=1 // pred_region
      %s69 = ssub.s32 16, 16
      %70 = vsyncadd [#allocation9], %s69
      %s72 = sshll.u32 [#allocation10], 4
      %s73 = int_to_ptr.vmem [resolvable:$true] %s72
      %75 = dma.hbm_to_vmem [thread:$0]  %s4, 16, %s73, [#allocation9]
    $region21: #{mlpnet_forward.1} parent=1 // pred_fallthru
      _
    // Predicated region
    $region22: #{mlpnet_forward.1} parent=1 // pred_check
      _
    $region23: #{mlpnet_forward.1} parent=1 // pred_check_branch
      %77 = sbr.rel (0) target = $region25
    $region24: #{mlpnet_forward.1} parent=1 // pred_region
      %s79 = ssub.s32 1024, 1024
      %80 = vsyncadd [#allocation12], %s79
      %s81 = sshll.u32 [#allocation11], 4
      %s82 = int_to_ptr.vmem [resolvable:$true] %s81
      %87 = dma.hbm_to_vmem [thread:$0]  %s5, 1024, %s82, [#allocation12], 64, 64, 4
    $region25: #{mlpnet_forward.1} parent=1 // pred_fallthru
      _
    // Predicated region
    $region26: #{mlpnet_forward.1} parent=1 // pred_check
      _
    $region27: #{mlpnet_forward.1} parent=1 // pred_check_branch
      %89 = sbr.rel (0) target = $region29
    $region28: #{mlpnet_forward.1} parent=1 // pred_region
      %s91 = ssub.s32 16, 16
      %92 = vsyncadd [#allocation12], %s91
      %s94 = sshll.u32 [#allocation13], 4
      %s95 = int_to_ptr.vmem [resolvable:$true] %s94
      %97 = dma.hbm_to_vmem [thread:$0]  %s6, 16, %s95, [#allocation12]
    $region29: #{mlpnet_forward.1} parent=1 // pred_fallthru
      _
    // Predicated region
    $region30: #{mlpnet_forward.1} parent=1 // pred_check
      _
    $region31: #{mlpnet_forward.1} parent=1 // pred_check_branch
      %99 = sbr.rel (0) target = $region33
    $region32: #{mlpnet_forward.1} parent=1 // pred_region
      %s101 = ssub.s32 1024, 1024
      %102 = vsyncadd [#allocation15], %s101
      %s103 = sshll.u32 [#allocation14], 4
      %s104 = int_to_ptr.vmem [resolvable:$true] %s103
      %109 = dma.hbm_to_vmem [thread:$0]  %s7, 1024, %s104, [#allocation15], 64, 64, 4
    $region33: #{mlpnet_forward.1} parent=1 // pred_fallthru
      _
    // Predicated region
    $region34: #{mlpnet_forward.1} parent=1 // pred_check
      _
    $region35: #{mlpnet_forward.1} parent=1 // pred_check_branch
      %111 = sbr.rel (0) target = $region37
    $region36: #{mlpnet_forward.1} parent=1 // pred_region
      %s113 = ssub.s32 16, 16
      %114 = vsyncadd [#allocation15], %s113
      %s116 = sshll.u32 [#allocation16], 4
      %s117 = int_to_ptr.vmem [resolvable:$true] %s116
      %119 = dma.hbm_to_vmem [thread:$0]  %s8, 16, %s117, [#allocation15]
    $region37: #{mlpnet_forward.1} parent=1 // pred_fallthru
      _
    // Predicated region
    $region38: #{mlpnet_forward.1} parent=1 // pred_check
      _
    $region39: #{mlpnet_forward.1} parent=1 // pred_check_branch
      %121 = sbr.rel (0) target = $region41
    $region40: #{mlpnet_forward.1} parent=1 // pred_region
      %122 = dma.done [#allocation3], 1024
    $region41: #{mlpnet_forward.1} parent=1 // pred_fallthru
      _
    // Predicated region
    $region42: #{mlpnet_forward.1} parent=1 // pred_check
      _
    $region43: #{mlpnet_forward.1} parent=1 // pred_check_branch
      %124 = sbr.rel (0) target = $region45
    $region44: #{mlpnet_forward.1} parent=1 // pred_region
      %125 = dma.done [#allocation6], 1024
    $region45: #{mlpnet_forward.1} parent=1 // pred_fallthru
      _
    // Predicated region
    $region46: #{mlpnet_forward.1} parent=1 // pred_check
      _
    $region47: #{mlpnet_forward.1} parent=1 // pred_check_branch
      %127 = sbr.rel (0) target = $region49
    $region48: #{mlpnet_forward.1} parent=1 // pred_region
      %128 = dma.done [#allocation6], 16
    $region49: #{mlpnet_forward.1} parent=1 // pred_fallthru
      _
    // Predicated region
    $region50: #{mlpnet_forward.1} parent=1 // pred_check
      _
    $region51: #{mlpnet_forward.1} parent=1 // pred_check_branch
      %130 = sbr.rel (0) target = $region53
    $region52: #{mlpnet_forward.1} parent=1 // pred_region
      %131 = dma.done [#allocation9], 1024
    $region53: #{mlpnet_forward.1} parent=1 // pred_fallthru
      _
    // Predicated region
    $region54: #{mlpnet_forward.1} parent=1 // pred_check
      _
    $region55: #{mlpnet_forward.1} parent=1 // pred_check_branch
      %133 = sbr.rel (0) target = $region57
    $region56: #{mlpnet_forward.1} parent=1 // pred_region
      %134 = dma.done [#allocation9], 16
    $region57: #{mlpnet_forward.1} parent=1 // pred_fallthru
      _
    // Predicated region
    $region58: #{mlpnet_forward.1} parent=1 // pred_check
      _
    $region59: #{mlpnet_forward.1} parent=1 // pred_check_branch
      %136 = sbr.rel (0) target = $region61
    $region60: #{mlpnet_forward.1} parent=1 // pred_region
      %137 = dma.done [#allocation12], 1024
    $region61: #{mlpnet_forward.1} parent=1 // pred_fallthru
      _
    // Predicated region
    $region62: #{mlpnet_forward.1} parent=1 // pred_check
      _
    $region63: #{mlpnet_forward.1} parent=1 // pred_check_branch
      %139 = sbr.rel (0) target = $region65
    $region64: #{mlpnet_forward.1} parent=1 // pred_region
      %140 = dma.done [#allocation12], 16
    $region65: #{mlpnet_forward.1} parent=1 // pred_fallthru
      _
    // Predicated region
    $region66: #{mlpnet_forward.1} parent=1 // pred_check
      _
    $region67: #{mlpnet_forward.1} parent=1 // pred_check_branch
      %142 = sbr.rel (0) target = $region69
    $region68: #{mlpnet_forward.1} parent=1 // pred_region
      %143 = dma.done [#allocation15], 1024
    $region69: #{mlpnet_forward.1} parent=1 // pred_fallthru
      _
    // Predicated region
    $region70: #{mlpnet_forward.1} parent=1 // pred_check
      _
    $region71: #{mlpnet_forward.1} parent=1 // pred_check_branch
      %145 = sbr.rel (0) target = $region73
    $region72: #{mlpnet_forward.1} parent=1 // pred_region
      %146 = dma.done [#allocation15], 16
    $region73: #{mlpnet_forward.1} parent=1 // pred_fallthru
      _
    %v148 = vld [vmem:[#allocation2] sm:$0xf]
    %v149 = vld [vmem:[#allocation2 + $0x4] sm:$0xf]
    %v150 = vld [vmem:[#allocation2 + $0x8] sm:$0xf]
    %v151 = vld [vmem:[#allocation2 + $0xc] sm:$0xf]
    %v152 = vld [vmem:[#allocation2 + $0x10] sm:$0xf]
    %v153 = vld [vmem:[#allocation2 + $0x14] sm:$0xf]
    %v154 = vld [vmem:[#allocation2 + $0x18] sm:$0xf]
    %v155 = vld [vmem:[#allocation2 + $0x1c] sm:$0xf]
    %v156 = vld [vmem:[#allocation2 + $0x20] sm:$0xf]
    %v157 = vld [vmem:[#allocation2 + $0x24] sm:$0xf]
    %v158 = vld [vmem:[#allocation2 + $0x28] sm:$0xf]
    %v159 = vld [vmem:[#allocation2 + $0x2c] sm:$0xf]
    %v160 = vld [vmem:[#allocation2 + $0x30] sm:$0xf]
    %v161 = vld [vmem:[#allocation2 + $0x34] sm:$0xf]
    %v162 = vld [vmem:[#allocation2 + $0x38] sm:$0xf]
    %v163 = vld [vmem:[#allocation2 + $0x3c] sm:$0xf]
    %v164 = vld [vmem:[#allocation5] sm:$0xf]
    %v165 = vld [vmem:[#allocation5 + $0x4] sm:$0xf]
    %v166 = vld [vmem:[#allocation5 + $0x8] sm:$0xf]
    %v167 = vld [vmem:[#allocation5 + $0xc] sm:$0xf]
    %v168 = vld [vmem:[#allocation5 + $0x10] sm:$0xf]
    %v169 = vld [vmem:[#allocation5 + $0x14] sm:$0xf]
    %v170 = vld [vmem:[#allocation5 + $0x18] sm:$0xf]
    %v171 = vld [vmem:[#allocation5 + $0x1c] sm:$0xf]
    %v172 = vld [vmem:[#allocation5 + $0x20] sm:$0xf]
    %v173 = vld [vmem:[#allocation5 + $0x24] sm:$0xf]
    %v174 = vld [vmem:[#allocation5 + $0x28] sm:$0xf]
    %v175 = vld [vmem:[#allocation5 + $0x2c] sm:$0xf]
    %v176 = vld [vmem:[#allocation5 + $0x30] sm:$0xf]
    %v177 = vld [vmem:[#allocation5 + $0x34] sm:$0xf]
    %v178 = vld [vmem:[#allocation5 + $0x38] sm:$0xf]
    %v179 = vld [vmem:[#allocation5 + $0x3c] sm:$0xf]
    %v180 = vld [vmem:[#allocation7] sm:$0x1]
    %v182 = vlaneseq
    %v183 = vshrl.u32 %v182, 7
    %v184 = vsub.s32 0, %v183
    %v185 = vrot.slane %v180, %v184
    %v203 = vunpack.c.l.b16 %v148
    %v204 = vunpack.c.l.b16 %v149
    %v205 = vunpack.c.l.b16 %v150
    %v206 = vunpack.c.l.b16 %v151
    %v207 = vunpack.c.l.b16 %v152
    %v208 = vunpack.c.l.b16 %v153
    %v209 = vunpack.c.l.b16 %v154
    %v210 = vunpack.c.l.b16 %v155
    %v211 = vunpack.c.l.b16 %v156
    %v212 = vunpack.c.l.b16 %v157
    %v213 = vunpack.c.l.b16 %v158
    %v214 = vunpack.c.l.b16 %v159
    %v215 = vunpack.c.l.b16 %v160
    %v216 = vunpack.c.l.b16 %v161
    %v217 = vunpack.c.l.b16 %v162
    %v218 = vunpack.c.l.b16 %v163
    %v219 = vpack.c.b16 %v204, %v203
    %v220 = vpack.c.b16 %v206, %v205
    %v221 = vpack.c.b16 %v208, %v207
    %v222 = vpack.c.b16 %v210, %v209
    %v223 = vpack.c.b16 %v212, %v211
    %v224 = vpack.c.b16 %v214, %v213
    %v225 = vpack.c.b16 %v216, %v215
    %v226 = vpack.c.b16 %v218, %v217
    %v251 = vunpack.c.l.b16 %v164
    %v252 = vunpack.c.l.b16 %v165
    %v253 = vunpack.c.l.b16 %v166
    %v254 = vunpack.c.l.b16 %v167
    %v255 = vunpack.c.l.b16 %v168
    %v256 = vunpack.c.l.b16 %v169
    %v257 = vunpack.c.l.b16 %v170
    %v258 = vunpack.c.l.b16 %v171
    %v259 = vunpack.c.l.b16 %v172
    %v260 = vunpack.c.l.b16 %v173
    %v261 = vunpack.c.l.b16 %v174
    %v262 = vunpack.c.l.b16 %v175
    %v263 = vunpack.c.l.b16 %v176
    %v264 = vunpack.c.l.b16 %v177
    %v265 = vunpack.c.l.b16 %v178
    %v266 = vunpack.c.l.b16 %v179
    %v267 = vpack.c.b16 %v252, %v251
    %v268 = vpack.c.b16 %v254, %v253
    %v269 = vpack.c.b16 %v256, %v255
    %v270 = vpack.c.b16 %v258, %v257
    %v271 = vpack.c.b16 %v260, %v259
    %v272 = vpack.c.b16 %v262, %v261
    %v273 = vpack.c.b16 %v264, %v263
    %v274 = vpack.c.b16 %v266, %v265
    %283 = vmatprep.subr.bf16.mxu0 0
    %284 = vmatpush1.bf16.msra.mxu0 %v267
    %285 = vmatprep.subr.bf16.mxu0 0
    %286 = vmatpush1.bf16.msra.mxu0 %v268
    %287 = vmatprep.subr.bf16.mxu0 0
    %288 = vmatpush1.bf16.msra.mxu0 %v269
    %289 = vmatprep.subr.bf16.mxu0 0
    %290 = vmatpush1.bf16.msra.mxu0 %v270
    %291 = vmatprep.subr.bf16.mxu0 0
    %292 = vmatpush1.bf16.msra.mxu0 %v271
    %293 = vmatprep.subr.bf16.mxu0 0
    %294 = vmatpush1.bf16.msra.mxu0 %v272
    %295 = vmatprep.subr.bf16.mxu0 0
    %296 = vmatpush1.bf16.msra.mxu0 %v273
    %297 = vmatprep.subr.bf16.mxu0 0
    %298 = vmatpush1.bf16.msra.mxu0 %v274
    %299 = vmatprep.subr.bf16.mxu0 0
    %300 = vmatpush1.bf16.msra.mxu0 0
    %301 = vmatprep.subr.bf16.mxu0 0
    %302 = vmatpush1.bf16.msra.mxu0 0
    %303 = vmatprep.subr.bf16.mxu0 0
    %304 = vmatpush1.bf16.msra.mxu0 0
    %305 = vmatprep.subr.bf16.mxu0 0
    %306 = vmatpush1.bf16.msra.mxu0 0
    %307 = vmatprep.subr.bf16.mxu0 0
    %308 = vmatpush1.bf16.msra.mxu0 0
    %309 = vmatprep.subr.bf16.mxu0 0
    %310 = vmatpush1.bf16.msra.mxu0 0
    %311 = vmatprep.subr.bf16.mxu0 0
    %312 = vmatpush1.bf16.msra.mxu0 0
    %313 = vmatprep.subr.bf16.mxu0 0
    %314 = vmatpush1.bf16.msra.mxu0 0
    %315 = vmatprep.mubr.bf16.mxu0 0
    %316 = vmatmul.mubr.bf16.gmra.mrb[0].mxu0 %v219
    %v317 = vpop.f32.mrb[0].mxu0
    %v318 = vadd.f32 %v185, %v317
    %v319 = vpop.f32.mrb[0].mxu0
    %v320 = vpop.f32.mrb[0].mxu0
    %v321 = vadd.f32 %v185, %v320
    %v322 = vpop.f32.mrb[0].mxu0
    %323 = vmatprep.mubr.bf16.mxu0 0
    %324 = vmatmul.mubr.bf16.gmra.mrb[0].mxu0 %v220
    %v325 = vpop.f32.mrb[0].mxu0
    %v326 = vadd.f32 %v185, %v325
    %v327 = vpop.f32.mrb[0].mxu0
    %v328 = vpop.f32.mrb[0].mxu0
    %v329 = vadd.f32 %v185, %v328
    %v330 = vpop.f32.mrb[0].mxu0
    %331 = vmatprep.mubr.bf16.mxu0 0
    %332 = vmatmul.mubr.bf16.gmra.mrb[0].mxu0 %v221
    %v333 = vpop.f32.mrb[0].mxu0
    %v334 = vadd.f32 %v185, %v333
    %v335 = vpop.f32.mrb[0].mxu0
    %v336 = vpop.f32.mrb[0].mxu0
    %v337 = vadd.f32 %v185, %v336
    %v338 = vpop.f32.mrb[0].mxu0
    %339 = vmatprep.mubr.bf16.mxu0 0
    %340 = vmatmul.mubr.bf16.gmra.mrb[0].mxu0 %v222
    %v341 = vpop.f32.mrb[0].mxu0
    %v342 = vadd.f32 %v185, %v341
    %v343 = vpop.f32.mrb[0].mxu0
    %v344 = vpop.f32.mrb[0].mxu0
    %v345 = vadd.f32 %v185, %v344
    %v346 = vpop.f32.mrb[0].mxu0
    %347 = vmatprep.mubr.bf16.mxu0 0
    %348 = vmatmul.mubr.bf16.gmra.mrb[0].mxu0 %v223
    %v349 = vpop.f32.mrb[0].mxu0
    %v350 = vadd.f32 %v185, %v349
    %v351 = vpop.f32.mrb[0].mxu0
    %v352 = vpop.f32.mrb[0].mxu0
    %v353 = vadd.f32 %v185, %v352
    %v354 = vpop.f32.mrb[0].mxu0
    %355 = vmatprep.mubr.bf16.mxu0 0
    %356 = vmatmul.mubr.bf16.gmra.mrb[0].mxu0 %v224
    %v357 = vpop.f32.mrb[0].mxu0
    %v358 = vadd.f32 %v185, %v357
    %v359 = vpop.f32.mrb[0].mxu0
    %v360 = vpop.f32.mrb[0].mxu0
    %v361 = vadd.f32 %v185, %v360
    %v362 = vpop.f32.mrb[0].mxu0
    %363 = vmatprep.mubr.bf16.mxu0 0
    %364 = vmatmul.mubr.bf16.gmra.mrb[0].mxu0 %v225
    %v365 = vpop.f32.mrb[0].mxu0
    %v366 = vadd.f32 %v185, %v365
    %v367 = vpop.f32.mrb[0].mxu0
    %v368 = vpop.f32.mrb[0].mxu0
    %v369 = vadd.f32 %v185, %v368
    %v370 = vpop.f32.mrb[0].mxu0
    %371 = vmatprep.mubr.bf16.mxu0 0
    %372 = vmatmul.mubr.bf16.gmra.mrb[0].mxu0 %v226
    %v373 = vpop.f32.mrb[0].mxu0
    %v374 = vadd.f32 %v185, %v373
    %v375 = vpop.f32.mrb[0].mxu0
    %v376 = vpop.f32.mrb[0].mxu0
    %v377 = vadd.f32 %v185, %v376
    %v378 = vpop.f32.mrb[0].mxu0
    %379 = vdwg.mxu0
    %v380 = vadd.f32 %v318, %v321
    %v381 = vadd.f32 %v380, %v326
    %v382 = vadd.f32 %v381, %v329
    %v383 = vadd.f32 %v382, %v334
    %v384 = vadd.f32 %v383, %v337
    %v385 = vadd.f32 %v384, %v342
    %v386 = vadd.f32 %v385, %v345
    %v387 = vadd.f32 %v386, %v350
    %v388 = vadd.f32 %v387, %v353
    %v389 = vadd.f32 %v388, %v358
    %v390 = vadd.f32 %v389, %v361
    %v391 = vadd.f32 %v390, %v366
    %v392 = vadd.f32 %v391, %v369
    %v393 = vadd.f32 %v392, %v374
    %v394 = vadd.f32 %v393, %v377
    %v395 = vrot.slane %v394, 4
    %v396 = vadd.f32 %v394, %v395
    %v397 = vrot.slane %v396, 2
    %v398 = vadd.f32 %v396, %v397
    %v399 = vrot.slane %v398, 1
    %v400 = vadd.f32 %v398, %v399
    %v401 = vrcp.pop 128.0
    %v402 = vmul.f32 %v400, %v401
    %v403 = vsub.f32 %v318, %v402
    %v404 = vsub.f32 %v321, %v402
    %v405 = vsub.f32 %v326, %v402
    %v406 = vsub.f32 %v329, %v402
    %v407 = vsub.f32 %v334, %v402
    %v408 = vsub.f32 %v337, %v402
    %v409 = vsub.f32 %v342, %v402
    %v410 = vsub.f32 %v345, %v402
    %v411 = vsub.f32 %v350, %v402
    %v412 = vsub.f32 %v353, %v402
    %v413 = vsub.f32 %v358, %v402
    %v414 = vsub.f32 %v361, %v402
    %v415 = vsub.f32 %v366, %v402
    %v416 = vsub.f32 %v369, %v402
    %v417 = vsub.f32 %v374, %v402
    %v418 = vsub.f32 %v377, %v402
    %v419 = vmul.f32 %v403, %v403
    %v420 = vmul.f32 %v404, %v404
    %v421 = vmul.f32 %v405, %v405
    %v422 = vmul.f32 %v406, %v406
    %v423 = vmul.f32 %v407, %v407
    %v424 = vmul.f32 %v408, %v408
    %v425 = vmul.f32 %v409, %v409
    %v426 = vmul.f32 %v410, %v410
    %v427 = vmul.f32 %v411, %v411
    %v428 = vmul.f32 %v412, %v412
    %v429 = vmul.f32 %v413, %v413
    %v430 = vmul.f32 %v414, %v414
    %v431 = vmul.f32 %v415, %v415
    %v432 = vmul.f32 %v416, %v416
    %v433 = vmul.f32 %v417, %v417
    %v434 = vmul.f32 %v418, %v418
    %v435 = vadd.f32 %v419, %v420
    %v436 = vadd.f32 %v435, %v421
    %v437 = vadd.f32 %v436, %v422
    %v438 = vadd.f32 %v437, %v423
    %v439 = vadd.f32 %v438, %v424
    %v440 = vadd.f32 %v439, %v425
    %v441 = vadd.f32 %v440, %v426
    %v442 = vadd.f32 %v441, %v427
    %v443 = vadd.f32 %v442, %v428
    %v444 = vadd.f32 %v443, %v429
    %v445 = vadd.f32 %v444, %v430
    %v446 = vadd.f32 %v445, %v431
    %v447 = vadd.f32 %v446, %v432
    %v448 = vadd.f32 %v447, %v433
    %v449 = vadd.f32 %v448, %v434
    %v450 = vrot.slane %v449, 4
    %v451 = vadd.f32 %v449, %v450
    %v452 = vrot.slane %v451, 2
    %v453 = vadd.f32 %v451, %v452
    %v454 = vrot.slane %v453, 1
    %v455 = vadd.f32 %v453, %v454
    %v456 = vmul.f32 %v455, %v401
    %v457 = vadd.f32 %v456, 1e-05
    %v458 = vrsqrt.pop %v457
    %v459 = vmul.f32 %v403, %v458
    %v460 = vmul.f32 %v404, %v458
    %v461 = vmul.f32 %v405, %v458
    %v462 = vmul.f32 %v406, %v458
    %v463 = vmul.f32 %v407, %v458
    %v464 = vmul.f32 %v408, %v458
    %v465 = vmul.f32 %v409, %v458
    %v466 = vmul.f32 %v410, %v458
    %v467 = vmul.f32 %v411, %v458
    %v468 = vmul.f32 %v412, %v458
    %v469 = vmul.f32 %v413, %v458
    %v470 = vmul.f32 %v414, %v458
    %v471 = vmul.f32 %v415, %v458
    %v472 = vmul.f32 %v416, %v458
    %v473 = vmul.f32 %v417, %v458
    %v474 = vmul.f32 %v418, %v458
    %v475 = vmax.f32 %v459, 0.0
    %v476 = vmax.f32 %v460, 0.0
    %v477 = vmax.f32 %v461, 0.0
    %v478 = vmax.f32 %v462, 0.0
    %v479 = vmax.f32 %v463, 0.0
    %v480 = vmax.f32 %v464, 0.0
    %v481 = vmax.f32 %v465, 0.0
    %v482 = vmax.f32 %v466, 0.0
    %v483 = vmax.f32 %v467, 0.0
    %v484 = vmax.f32 %v468, 0.0
    %v485 = vmax.f32 %v469, 0.0
    %v486 = vmax.f32 %v470, 0.0
    %v487 = vmax.f32 %v471, 0.0
    %v488 = vmax.f32 %v472, 0.0
    %v489 = vmax.f32 %v473, 0.0
    %v490 = vmax.f32 %v474, 0.0
    %v491 = vpack.c.bf16 %v476, %v475
    %v492 = vpack.c.bf16 %v478, %v477
    %v493 = vpack.c.bf16 %v480, %v479
    %v494 = vpack.c.bf16 %v482, %v481
    %v495 = vpack.c.bf16 %v484, %v483
    %v496 = vpack.c.bf16 %v486, %v485
    %v497 = vpack.c.bf16 %v488, %v487
    %v498 = vpack.c.bf16 %v490, %v489
    %v499 = vld [vmem:[#allocation8] sm:$0xf]
    %v500 = vld [vmem:[#allocation8 + $0x4] sm:$0xf]
    %v501 = vld [vmem:[#allocation8 + $0x8] sm:$0xf]
    %v502 = vld [vmem:[#allocation8 + $0xc] sm:$0xf]
    %v503 = vld [vmem:[#allocation8 + $0x10] sm:$0xf]
    %v504 = vld [vmem:[#allocation8 + $0x14] sm:$0xf]
    %v505 = vld [vmem:[#allocation8 + $0x18] sm:$0xf]
    %v506 = vld [vmem:[#allocation8 + $0x1c] sm:$0xf]
    %v507 = vld [vmem:[#allocation8 + $0x20] sm:$0xf]
    %v508 = vld [vmem:[#allocation8 + $0x24] sm:$0xf]
    %v509 = vld [vmem:[#allocation8 + $0x28] sm:$0xf]
    %v510 = vld [vmem:[#allocation8 + $0x2c] sm:$0xf]
    %v511 = vld [vmem:[#allocation8 + $0x30] sm:$0xf]
    %v512 = vld [vmem:[#allocation8 + $0x34] sm:$0xf]
    %v513 = vld [vmem:[#allocation8 + $0x38] sm:$0xf]
    %v514 = vld [vmem:[#allocation8 + $0x3c] sm:$0xf]
    %v515 = vld [vmem:[#allocation10] sm:$0x1]
    %v517 = vlaneseq
    %v518 = vshrl.u32 %v517, 7
    %v519 = vsub.s32 0, %v518
    %v520 = vrot.slane %v515, %v519
    %v538 = vunpack.c.l.b16 %v499
    %v539 = vunpack.c.l.b16 %v500
    %v540 = vunpack.c.l.b16 %v501
    %v541 = vunpack.c.l.b16 %v502
    %v542 = vunpack.c.l.b16 %v503
    %v543 = vunpack.c.l.b16 %v504
    %v544 = vunpack.c.l.b16 %v505
    %v545 = vunpack.c.l.b16 %v506
    %v546 = vunpack.c.l.b16 %v507
    %v547 = vunpack.c.l.b16 %v508
    %v548 = vunpack.c.l.b16 %v509
    %v549 = vunpack.c.l.b16 %v510
    %v550 = vunpack.c.l.b16 %v511
    %v551 = vunpack.c.l.b16 %v512
    %v552 = vunpack.c.l.b16 %v513
    %v553 = vunpack.c.l.b16 %v514
    %v554 = vpack.c.b16 %v539, %v538
    %v555 = vpack.c.b16 %v541, %v540
    %v556 = vpack.c.b16 %v543, %v542
    %v557 = vpack.c.b16 %v545, %v544
    %v558 = vpack.c.b16 %v547, %v546
    %v559 = vpack.c.b16 %v549, %v548
    %v560 = vpack.c.b16 %v551, %v550
    %v561 = vpack.c.b16 %v553, %v552
    %570 = vmatprep.subr.bf16.mxu0 0
    %571 = vmatpush1.bf16.msra.mxu0 %v554
    %572 = vmatprep.subr.bf16.mxu0 0
    %573 = vmatpush1.bf16.msra.mxu0 %v555
    %574 = vmatprep.subr.bf16.mxu0 0
    %575 = vmatpush1.bf16.msra.mxu0 %v556
    %576 = vmatprep.subr.bf16.mxu0 0
    %577 = vmatpush1.bf16.msra.mxu0 %v557
    %578 = vmatprep.subr.bf16.mxu0 0
    %579 = vmatpush1.bf16.msra.mxu0 %v558
    %580 = vmatprep.subr.bf16.mxu0 0
    %581 = vmatpush1.bf16.msra.mxu0 %v559
    %582 = vmatprep.subr.bf16.mxu0 0
    %583 = vmatpush1.bf16.msra.mxu0 %v560
    %584 = vmatprep.subr.bf16.mxu0 0
    %585 = vmatpush1.bf16.msra.mxu0 %v561
    %586 = vmatprep.subr.bf16.mxu0 0
    %587 = vmatpush1.bf16.msra.mxu0 0
    %588 = vmatprep.subr.bf16.mxu0 0
    %589 = vmatpush1.bf16.msra.mxu0 0
    %590 = vmatprep.subr.bf16.mxu0 0
    %591 = vmatpush1.bf16.msra.mxu0 0
    %592 = vmatprep.subr.bf16.mxu0 0
    %593 = vmatpush1.bf16.msra.mxu0 0
    %594 = vmatprep.subr.bf16.mxu0 0
    %595 = vmatpush1.bf16.msra.mxu0 0
    %596 = vmatprep.subr.bf16.mxu0 0
    %597 = vmatpush1.bf16.msra.mxu0 0
    %598 = vmatprep.subr.bf16.mxu0 0
    %599 = vmatpush1.bf16.msra.mxu0 0
    %600 = vmatprep.subr.bf16.mxu0 0
    %601 = vmatpush1.bf16.msra.mxu0 0
    %602 = vmatprep.mubr.bf16.mxu0 0
    %603 = vmatmul.mubr.bf16.gmra.mrb[0].mxu0 %v491
    %v604 = vpop.f32.mrb[0].mxu0
    %v605 = vadd.f32 %v520, %v604
    %v606 = vpop.f32.mrb[0].mxu0
    %v607 = vpop.f32.mrb[0].mxu0
    %v608 = vadd.f32 %v520, %v607
    %v609 = vpop.f32.mrb[0].mxu0
    %610 = vmatprep.mubr.bf16.mxu0 0
    %611 = vmatmul.mubr.bf16.gmra.mrb[0].mxu0 %v492
    %v612 = vpop.f32.mrb[0].mxu0
    %v613 = vadd.f32 %v520, %v612
    %v614 = vpop.f32.mrb[0].mxu0
    %v615 = vpop.f32.mrb[0].mxu0
    %v616 = vadd.f32 %v520, %v615
    %v617 = vpop.f32.mrb[0].mxu0
    %618 = vmatprep.mubr.bf16.mxu0 0
    %619 = vmatmul.mubr.bf16.gmra.mrb[0].mxu0 %v493
    %v620 = vpop.f32.mrb[0].mxu0
    %v621 = vadd.f32 %v520, %v620
    %v622 = vpop.f32.mrb[0].mxu0
    %v623 = vpop.f32.mrb[0].mxu0
    %v624 = vadd.f32 %v520, %v623
    %v625 = vpop.f32.mrb[0].mxu0
    %626 = vmatprep.mubr.bf16.mxu0 0
    %627 = vmatmul.mubr.bf16.gmra.mrb[0].mxu0 %v494
    %v628 = vpop.f32.mrb[0].mxu0
    %v629 = vadd.f32 %v520, %v628
    %v630 = vpop.f32.mrb[0].mxu0
    %v631 = vpop.f32.mrb[0].mxu0
    %v632 = vadd.f32 %v520, %v631
    %v633 = vpop.f32.mrb[0].mxu0
    %634 = vmatprep.mubr.bf16.mxu0 0
    %635 = vmatmul.mubr.bf16.gmra.mrb[0].mxu0 %v495
    %v636 = vpop.f32.mrb[0].mxu0
    %v637 = vadd.f32 %v520, %v636
    %v638 = vpop.f32.mrb[0].mxu0
    %v639 = vpop.f32.mrb[0].mxu0
    %v640 = vadd.f32 %v520, %v639
    %v641 = vpop.f32.mrb[0].mxu0
    %642 = vmatprep.mubr.bf16.mxu0 0
    %643 = vmatmul.mubr.bf16.gmra.mrb[0].mxu0 %v496
    %v644 = vpop.f32.mrb[0].mxu0
    %v645 = vadd.f32 %v520, %v644
    %v646 = vpop.f32.mrb[0].mxu0
    %v647 = vpop.f32.mrb[0].mxu0
    %v648 = vadd.f32 %v520, %v647
    %v649 = vpop.f32.mrb[0].mxu0
    %650 = vmatprep.mubr.bf16.mxu0 0
    %651 = vmatmul.mubr.bf16.gmra.mrb[0].mxu0 %v497
    %v652 = vpop.f32.mrb[0].mxu0
    %v653 = vadd.f32 %v520, %v652
    %v654 = vpop.f32.mrb[0].mxu0
    %v655 = vpop.f32.mrb[0].mxu0
    %v656 = vadd.f32 %v520, %v655
    %v657 = vpop.f32.mrb[0].mxu0
    %658 = vmatprep.mubr.bf16.mxu0 0
    %659 = vmatmul.mubr.bf16.gmra.mrb[0].mxu0 %v498
    %v660 = vpop.f32.mrb[0].mxu0
    %v661 = vadd.f32 %v520, %v660
    %v662 = vpop.f32.mrb[0].mxu0
    %v663 = vpop.f32.mrb[0].mxu0
    %v664 = vadd.f32 %v520, %v663
    %v665 = vpop.f32.mrb[0].mxu0
    %666 = vdwg.mxu0
    %v667 = vadd.f32 %v605, %v608
    %v668 = vadd.f32 %v667, %v613
    %v669 = vadd.f32 %v668, %v616
    %v670 = vadd.f32 %v669, %v621
    %v671 = vadd.f32 %v670, %v624
    %v672 = vadd.f32 %v671, %v629
    %v673 = vadd.f32 %v672, %v632
    %v674 = vadd.f32 %v673, %v637
    %v675 = vadd.f32 %v674, %v640
    %v676 = vadd.f32 %v675, %v645
    %v677 = vadd.f32 %v676, %v648
    %v678 = vadd.f32 %v677, %v653
    %v679 = vadd.f32 %v678, %v656
    %v680 = vadd.f32 %v679, %v661
    %v681 = vadd.f32 %v680, %v664
    %v682 = vrot.slane %v681, 4
    %v683 = vadd.f32 %v681, %v682
    %v684 = vrot.slane %v683, 2
    %v685 = vadd.f32 %v683, %v684
    %v686 = vrot.slane %v685, 1
    %v687 = vadd.f32 %v685, %v686
    %v688 = vmul.f32 %v687, %v401
    %v689 = vsub.f32 %v605, %v688
    %v690 = vsub.f32 %v608, %v688
    %v691 = vsub.f32 %v613, %v688
    %v692 = vsub.f32 %v616, %v688
    %v693 = vsub.f32 %v621, %v688
    %v694 = vsub.f32 %v624, %v688
    %v695 = vsub.f32 %v629, %v688
    %v696 = vsub.f32 %v632, %v688
    %v697 = vsub.f32 %v637, %v688
    %v698 = vsub.f32 %v640, %v688
    %v699 = vsub.f32 %v645, %v688
    %v700 = vsub.f32 %v648, %v688
    %v701 = vsub.f32 %v653, %v688
    %v702 = vsub.f32 %v656, %v688
    %v703 = vsub.f32 %v661, %v688
    %v704 = vsub.f32 %v664, %v688
    %v705 = vmul.f32 %v689, %v689
    %v706 = vmul.f32 %v690, %v690
    %v707 = vmul.f32 %v691, %v691
    %v708 = vmul.f32 %v692, %v692
    %v709 = vmul.f32 %v693, %v693
    %v710 = vmul.f32 %v694, %v694
    %v711 = vmul.f32 %v695, %v695
    %v712 = vmul.f32 %v696, %v696
    %v713 = vmul.f32 %v697, %v697
    %v714 = vmul.f32 %v698, %v698
    %v715 = vmul.f32 %v699, %v699
    %v716 = vmul.f32 %v700, %v700
    %v717 = vmul.f32 %v701, %v701
    %v718 = vmul.f32 %v702, %v702
    %v719 = vmul.f32 %v703, %v703
    %v720 = vmul.f32 %v704, %v704
    %v721 = vadd.f32 %v705, %v706
    %v722 = vadd.f32 %v721, %v707
    %v723 = vadd.f32 %v722, %v708
    %v724 = vadd.f32 %v723, %v709
    %v725 = vadd.f32 %v724, %v710
    %v726 = vadd.f32 %v725, %v711
    %v727 = vadd.f32 %v726, %v712
    %v728 = vadd.f32 %v727, %v713
    %v729 = vadd.f32 %v728, %v714
    %v730 = vadd.f32 %v729, %v715
    %v731 = vadd.f32 %v730, %v716
    %v732 = vadd.f32 %v731, %v717
    %v733 = vadd.f32 %v732, %v718
    %v734 = vadd.f32 %v733, %v719
    %v735 = vadd.f32 %v734, %v720
    %v736 = vrot.slane %v735, 4
    %v737 = vadd.f32 %v735, %v736
    %v738 = vrot.slane %v737, 2
    %v739 = vadd.f32 %v737, %v738
    %v740 = vrot.slane %v739, 1
    %v741 = vadd.f32 %v739, %v740
    %v742 = vmul.f32 %v741, %v401
    %v743 = vadd.f32 %v742, 1e-05
    %v744 = vrsqrt.pop %v743
    %v745 = vmul.f32 %v689, %v744
    %v746 = vmul.f32 %v690, %v744
    %v747 = vmul.f32 %v691, %v744
    %v748 = vmul.f32 %v692, %v744
    %v749 = vmul.f32 %v693, %v744
    %v750 = vmul.f32 %v694, %v744
    %v751 = vmul.f32 %v695, %v744
    %v752 = vmul.f32 %v696, %v744
    %v753 = vmul.f32 %v697, %v744
    %v754 = vmul.f32 %v698, %v744
    %v755 = vmul.f32 %v699, %v744
    %v756 = vmul.f32 %v700, %v744
    %v757 = vmul.f32 %v701, %v744
    %v758 = vmul.f32 %v702, %v744
    %v759 = vmul.f32 %v703, %v744
    %v760 = vmul.f32 %v704, %v744
    %v761 = vmax.f32 %v745, 0.0
    %v762 = vmax.f32 %v746, 0.0
    %v763 = vmax.f32 %v747, 0.0
    %v764 = vmax.f32 %v748, 0.0
    %v765 = vmax.f32 %v749, 0.0
    %v766 = vmax.f32 %v750, 0.0
    %v767 = vmax.f32 %v751, 0.0
    %v768 = vmax.f32 %v752, 0.0
    %v769 = vmax.f32 %v753, 0.0
    %v770 = vmax.f32 %v754, 0.0
    %v771 = vmax.f32 %v755, 0.0
    %v772 = vmax.f32 %v756, 0.0
    %v773 = vmax.f32 %v757, 0.0
    %v774 = vmax.f32 %v758, 0.0
    %v775 = vmax.f32 %v759, 0.0
    %v776 = vmax.f32 %v760, 0.0
    %v777 = vpack.c.bf16 %v762, %v761
    %v778 = vpack.c.bf16 %v764, %v763
    %v779 = vpack.c.bf16 %v766, %v765
    %v780 = vpack.c.bf16 %v768, %v767
    %v781 = vpack.c.bf16 %v770, %v769
    %v782 = vpack.c.bf16 %v772, %v771
    %v783 = vpack.c.bf16 %v774, %v773
    %v784 = vpack.c.bf16 %v776, %v775
    %v785 = vld [vmem:[#allocation11] sm:$0xf]
    %v786 = vld [vmem:[#allocation11 + $0x4] sm:$0xf]
    %v787 = vld [vmem:[#allocation11 + $0x8] sm:$0xf]
    %v788 = vld [vmem:[#allocation11 + $0xc] sm:$0xf]
    %v789 = vld [vmem:[#allocation11 + $0x10] sm:$0xf]
    %v790 = vld [vmem:[#allocation11 + $0x14] sm:$0xf]
    %v791 = vld [vmem:[#allocation11 + $0x18] sm:$0xf]
    %v792 = vld [vmem:[#allocation11 + $0x1c] sm:$0xf]
    %v793 = vld [vmem:[#allocation11 + $0x20] sm:$0xf]
    %v794 = vld [vmem:[#allocation11 + $0x24] sm:$0xf]
    %v795 = vld [vmem:[#allocation11 + $0x28] sm:$0xf]
    %v796 = vld [vmem:[#allocation11 + $0x2c] sm:$0xf]
    %v797 = vld [vmem:[#allocation11 + $0x30] sm:$0xf]
    %v798 = vld [vmem:[#allocation11 + $0x34] sm:$0xf]
    %v799 = vld [vmem:[#allocation11 + $0x38] sm:$0xf]
    %v800 = vld [vmem:[#allocation11 + $0x3c] sm:$0xf]
    %v801 = vld [vmem:[#allocation13] sm:$0x1]
    %v803 = vlaneseq
    %v804 = vshrl.u32 %v803, 7
    %v805 = vsub.s32 0, %v804
    %v806 = vrot.slane %v801, %v805
    %v824 = vunpack.c.l.b16 %v785
    %v825 = vunpack.c.l.b16 %v786
    %v826 = vunpack.c.l.b16 %v787
    %v827 = vunpack.c.l.b16 %v788
    %v828 = vunpack.c.l.b16 %v789
    %v829 = vunpack.c.l.b16 %v790
    %v830 = vunpack.c.l.b16 %v791
    %v831 = vunpack.c.l.b16 %v792
    %v832 = vunpack.c.l.b16 %v793
    %v833 = vunpack.c.l.b16 %v794
    %v834 = vunpack.c.l.b16 %v795
    %v835 = vunpack.c.l.b16 %v796
    %v836 = vunpack.c.l.b16 %v797
    %v837 = vunpack.c.l.b16 %v798
    %v838 = vunpack.c.l.b16 %v799
    %v839 = vunpack.c.l.b16 %v800
    %v840 = vpack.c.b16 %v825, %v824
    %v841 = vpack.c.b16 %v827, %v826
    %v842 = vpack.c.b16 %v829, %v828
    %v843 = vpack.c.b16 %v831, %v830
    %v844 = vpack.c.b16 %v833, %v832
    %v845 = vpack.c.b16 %v835, %v834
    %v846 = vpack.c.b16 %v837, %v836
    %v847 = vpack.c.b16 %v839, %v838
    %856 = vmatprep.subr.bf16.mxu0 0
    %857 = vmatpush1.bf16.msra.mxu0 %v840
    %858 = vmatprep.subr.bf16.mxu0 0
    %859 = vmatpush1.bf16.msra.mxu0 %v841
    %860 = vmatprep.subr.bf16.mxu0 0
    %861 = vmatpush1.bf16.msra.mxu0 %v842
    %862 = vmatprep.subr.bf16.mxu0 0
    %863 = vmatpush1.bf16.msra.mxu0 %v843
    %864 = vmatprep.subr.bf16.mxu0 0
    %865 = vmatpush1.bf16.msra.mxu0 %v844
    %866 = vmatprep.subr.bf16.mxu0 0
    %867 = vmatpush1.bf16.msra.mxu0 %v845
    %868 = vmatprep.subr.bf16.mxu0 0
    %869 = vmatpush1.bf16.msra.mxu0 %v846
    %870 = vmatprep.subr.bf16.mxu0 0
    %871 = vmatpush1.bf16.msra.mxu0 %v847
    %872 = vmatprep.subr.bf16.mxu0 0
    %873 = vmatpush1.bf16.msra.mxu0 0
    %874 = vmatprep.subr.bf16.mxu0 0
    %875 = vmatpush1.bf16.msra.mxu0 0
    %876 = vmatprep.subr.bf16.mxu0 0
    %877 = vmatpush1.bf16.msra.mxu0 0
    %878 = vmatprep.subr.bf16.mxu0 0
    %879 = vmatpush1.bf16.msra.mxu0 0
    %880 = vmatprep.subr.bf16.mxu0 0
    %881 = vmatpush1.bf16.msra.mxu0 0
    %882 = vmatprep.subr.bf16.mxu0 0
    %883 = vmatpush1.bf16.msra.mxu0 0
    %884 = vmatprep.subr.bf16.mxu0 0
    %885 = vmatpush1.bf16.msra.mxu0 0
    %886 = vmatprep.subr.bf16.mxu0 0
    %887 = vmatpush1.bf16.msra.mxu0 0
    %888 = vmatprep.mubr.bf16.mxu0 0
    %889 = vmatmul.mubr.bf16.gmra.mrb[0].mxu0 %v777
    %v890 = vpop.f32.mrb[0].mxu0
    %v891 = vadd.f32 %v806, %v890
    %v892 = vpop.f32.mrb[0].mxu0
    %v893 = vpop.f32.mrb[0].mxu0
    %v894 = vadd.f32 %v806, %v893
    %v895 = vpop.f32.mrb[0].mxu0
    %896 = vmatprep.mubr.bf16.mxu0 0
    %897 = vmatmul.mubr.bf16.gmra.mrb[0].mxu0 %v778
    %v898 = vpop.f32.mrb[0].mxu0
    %v899 = vadd.f32 %v806, %v898
    %v900 = vpop.f32.mrb[0].mxu0
    %v901 = vpop.f32.mrb[0].mxu0
    %v902 = vadd.f32 %v806, %v901
    %v903 = vpop.f32.mrb[0].mxu0
    %904 = vmatprep.mubr.bf16.mxu0 0
    %905 = vmatmul.mubr.bf16.gmra.mrb[0].mxu0 %v779
    %v906 = vpop.f32.mrb[0].mxu0
    %v907 = vadd.f32 %v806, %v906
    %v908 = vpop.f32.mrb[0].mxu0
    %v909 = vpop.f32.mrb[0].mxu0
    %v910 = vadd.f32 %v806, %v909
    %v911 = vpop.f32.mrb[0].mxu0
    %912 = vmatprep.mubr.bf16.mxu0 0
    %913 = vmatmul.mubr.bf16.gmra.mrb[0].mxu0 %v780
    %v914 = vpop.f32.mrb[0].mxu0
    %v915 = vadd.f32 %v806, %v914
    %v916 = vpop.f32.mrb[0].mxu0
    %v917 = vpop.f32.mrb[0].mxu0
    %v918 = vadd.f32 %v806, %v917
    %v919 = vpop.f32.mrb[0].mxu0
    %920 = vmatprep.mubr.bf16.mxu0 0
    %921 = vmatmul.mubr.bf16.gmra.mrb[0].mxu0 %v781
    %v922 = vpop.f32.mrb[0].mxu0
    %v923 = vadd.f32 %v806, %v922
    %v924 = vpop.f32.mrb[0].mxu0
    %v925 = vpop.f32.mrb[0].mxu0
    %v926 = vadd.f32 %v806, %v925
    %v927 = vpop.f32.mrb[0].mxu0
    %928 = vmatprep.mubr.bf16.mxu0 0
    %929 = vmatmul.mubr.bf16.gmra.mrb[0].mxu0 %v782
    %v930 = vpop.f32.mrb[0].mxu0
    %v931 = vadd.f32 %v806, %v930
    %v932 = vpop.f32.mrb[0].mxu0
    %v933 = vpop.f32.mrb[0].mxu0
    %v934 = vadd.f32 %v806, %v933
    %v935 = vpop.f32.mrb[0].mxu0
    %936 = vmatprep.mubr.bf16.mxu0 0
    %937 = vmatmul.mubr.bf16.gmra.mrb[0].mxu0 %v783
    %v938 = vpop.f32.mrb[0].mxu0
    %v939 = vadd.f32 %v806, %v938
    %v940 = vpop.f32.mrb[0].mxu0
    %v941 = vpop.f32.mrb[0].mxu0
    %v942 = vadd.f32 %v806, %v941
    %v943 = vpop.f32.mrb[0].mxu0
    %944 = vmatprep.mubr.bf16.mxu0 0
    %945 = vmatmul.mubr.bf16.gmra.mrb[0].mxu0 %v784
    %v946 = vpop.f32.mrb[0].mxu0
    %v947 = vadd.f32 %v806, %v946
    %v948 = vpop.f32.mrb[0].mxu0
    %v949 = vpop.f32.mrb[0].mxu0
    %v950 = vadd.f32 %v806, %v949
    %v951 = vpop.f32.mrb[0].mxu0
    %952 = vdwg.mxu0
    %v953 = vadd.f32 %v891, %v894
    %v954 = vadd.f32 %v953, %v899
    %v955 = vadd.f32 %v954, %v902
    %v956 = vadd.f32 %v955, %v907
    %v957 = vadd.f32 %v956, %v910
    %v958 = vadd.f32 %v957, %v915
    %v959 = vadd.f32 %v958, %v918
    %v960 = vadd.f32 %v959, %v923
    %v961 = vadd.f32 %v960, %v926
    %v962 = vadd.f32 %v961, %v931
    %v963 = vadd.f32 %v962, %v934
    %v964 = vadd.f32 %v963, %v939
    %v965 = vadd.f32 %v964, %v942
    %v966 = vadd.f32 %v965, %v947
    %v967 = vadd.f32 %v966, %v950
    %v968 = vrot.slane %v967, 4
    %v969 = vadd.f32 %v967, %v968
    %v970 = vrot.slane %v969, 2
    %v971 = vadd.f32 %v969, %v970
    %v972 = vrot.slane %v971, 1
    %v973 = vadd.f32 %v971, %v972
    %v974 = vmul.f32 %v973, %v401
    %v975 = vsub.f32 %v891, %v974
    %v976 = vsub.f32 %v894, %v974
    %v977 = vsub.f32 %v899, %v974
    %v978 = vsub.f32 %v902, %v974
    %v979 = vsub.f32 %v907, %v974
    %v980 = vsub.f32 %v910, %v974
    %v981 = vsub.f32 %v915, %v974
    %v982 = vsub.f32 %v918, %v974
    %v983 = vsub.f32 %v923, %v974
    %v984 = vsub.f32 %v926, %v974
    %v985 = vsub.f32 %v931, %v974
    %v986 = vsub.f32 %v934, %v974
    %v987 = vsub.f32 %v939, %v974
    %v988 = vsub.f32 %v942, %v974
    %v989 = vsub.f32 %v947, %v974
    %v990 = vsub.f32 %v950, %v974
    %v991 = vmul.f32 %v975, %v975
    %v992 = vmul.f32 %v976, %v976
    %v993 = vmul.f32 %v977, %v977
    %v994 = vmul.f32 %v978, %v978
    %v995 = vmul.f32 %v979, %v979
    %v996 = vmul.f32 %v980, %v980
    %v997 = vmul.f32 %v981, %v981
    %v998 = vmul.f32 %v982, %v982
    %v999 = vmul.f32 %v983, %v983
    %v1000 = vmul.f32 %v984, %v984
    %v1001 = vmul.f32 %v985, %v985
    %v1002 = vmul.f32 %v986, %v986
    %v1003 = vmul.f32 %v987, %v987
    %v1004 = vmul.f32 %v988, %v988
    %v1005 = vmul.f32 %v989, %v989
    %v1006 = vmul.f32 %v990, %v990
    %v1007 = vadd.f32 %v991, %v992
    %v1008 = vadd.f32 %v1007, %v993
    %v1009 = vadd.f32 %v1008, %v994
    %v1010 = vadd.f32 %v1009, %v995
    %v1011 = vadd.f32 %v1010, %v996
    %v1012 = vadd.f32 %v1011, %v997
    %v1013 = vadd.f32 %v1012, %v998
    %v1014 = vadd.f32 %v1013, %v999
    %v1015 = vadd.f32 %v1014, %v1000
    %v1016 = vadd.f32 %v1015, %v1001
    %v1017 = vadd.f32 %v1016, %v1002
    %v1018 = vadd.f32 %v1017, %v1003
    %v1019 = vadd.f32 %v1018, %v1004
    %v1020 = vadd.f32 %v1019, %v1005
    %v1021 = vadd.f32 %v1020, %v1006
    %v1022 = vrot.slane %v1021, 4
    %v1023 = vadd.f32 %v1021, %v1022
    %v1024 = vrot.slane %v1023, 2
    %v1025 = vadd.f32 %v1023, %v1024
    %v1026 = vrot.slane %v1025, 1
    %v1027 = vadd.f32 %v1025, %v1026
    %v1028 = vmul.f32 %v1027, %v401
    %v1029 = vadd.f32 %v1028, 1e-05
    %v1030 = vrsqrt.pop %v1029
    %v1031 = vmul.f32 %v975, %v1030
    %v1032 = vmul.f32 %v976, %v1030
    %v1033 = vmul.f32 %v977, %v1030
    %v1034 = vmul.f32 %v978, %v1030
    %v1035 = vmul.f32 %v979, %v1030
    %v1036 = vmul.f32 %v980, %v1030
    %v1037 = vmul.f32 %v981, %v1030
    %v1038 = vmul.f32 %v982, %v1030
    %v1039 = vmul.f32 %v983, %v1030
    %v1040 = vmul.f32 %v984, %v1030
    %v1041 = vmul.f32 %v985, %v1030
    %v1042 = vmul.f32 %v986, %v1030
    %v1043 = vmul.f32 %v987, %v1030
    %v1044 = vmul.f32 %v988, %v1030
    %v1045 = vmul.f32 %v989, %v1030
    %v1046 = vmul.f32 %v990, %v1030
    %v1047 = vmax.f32 %v1031, 0.0
    %v1048 = vmax.f32 %v1032, 0.0
    %v1049 = vmax.f32 %v1033, 0.0
    %v1050 = vmax.f32 %v1034, 0.0
    %v1051 = vmax.f32 %v1035, 0.0
    %v1052 = vmax.f32 %v1036, 0.0
    %v1053 = vmax.f32 %v1037, 0.0
    %v1054 = vmax.f32 %v1038, 0.0
    %v1055 = vmax.f32 %v1039, 0.0
    %v1056 = vmax.f32 %v1040, 0.0
    %v1057 = vmax.f32 %v1041, 0.0
    %v1058 = vmax.f32 %v1042, 0.0
    %v1059 = vmax.f32 %v1043, 0.0
    %v1060 = vmax.f32 %v1044, 0.0
    %v1061 = vmax.f32 %v1045, 0.0
    %v1062 = vmax.f32 %v1046, 0.0
    %v1063 = vpack.c.bf16 %v1048, %v1047
    %v1064 = vpack.c.bf16 %v1050, %v1049
    %v1065 = vpack.c.bf16 %v1052, %v1051
    %v1066 = vpack.c.bf16 %v1054, %v1053
    %v1067 = vpack.c.bf16 %v1056, %v1055
    %v1068 = vpack.c.bf16 %v1058, %v1057
    %v1069 = vpack.c.bf16 %v1060, %v1059
    %v1070 = vpack.c.bf16 %v1062, %v1061
    %v1071 = vld [vmem:[#allocation14] sm:$0xf]
    %v1072 = vld [vmem:[#allocation14 + $0x4] sm:$0xf]
    %v1073 = vld [vmem:[#allocation14 + $0x8] sm:$0xf]
    %v1074 = vld [vmem:[#allocation14 + $0xc] sm:$0xf]
    %v1075 = vld [vmem:[#allocation14 + $0x10] sm:$0xf]
    %v1076 = vld [vmem:[#allocation14 + $0x14] sm:$0xf]
    %v1077 = vld [vmem:[#allocation14 + $0x18] sm:$0xf]
    %v1078 = vld [vmem:[#allocation14 + $0x1c] sm:$0xf]
    %v1079 = vld [vmem:[#allocation14 + $0x20] sm:$0xf]
    %v1080 = vld [vmem:[#allocation14 + $0x24] sm:$0xf]
    %v1081 = vld [vmem:[#allocation14 + $0x28] sm:$0xf]
    %v1082 = vld [vmem:[#allocation14 + $0x2c] sm:$0xf]
    %v1083 = vld [vmem:[#allocation14 + $0x30] sm:$0xf]
    %v1084 = vld [vmem:[#allocation14 + $0x34] sm:$0xf]
    %v1085 = vld [vmem:[#allocation14 + $0x38] sm:$0xf]
    %v1086 = vld [vmem:[#allocation14 + $0x3c] sm:$0xf]
    %v1087 = vld [vmem:[#allocation16] sm:$0x1]
    %v1089 = vlaneseq
    %v1090 = vshrl.u32 %v1089, 7
    %v1091 = vsub.s32 0, %v1090
    %v1092 = vrot.slane %v1087, %v1091
    %v1110 = vunpack.c.l.b16 %v1071
    %v1111 = vunpack.c.l.b16 %v1072
    %v1112 = vunpack.c.l.b16 %v1073
    %v1113 = vunpack.c.l.b16 %v1074
    %v1114 = vunpack.c.l.b16 %v1075
    %v1115 = vunpack.c.l.b16 %v1076
    %v1116 = vunpack.c.l.b16 %v1077
    %v1117 = vunpack.c.l.b16 %v1078
    %v1118 = vunpack.c.l.b16 %v1079
    %v1119 = vunpack.c.l.b16 %v1080
    %v1120 = vunpack.c.l.b16 %v1081
    %v1121 = vunpack.c.l.b16 %v1082
    %v1122 = vunpack.c.l.b16 %v1083
    %v1123 = vunpack.c.l.b16 %v1084
    %v1124 = vunpack.c.l.b16 %v1085
    %v1125 = vunpack.c.l.b16 %v1086
    %v1126 = vpack.c.b16 %v1111, %v1110
    %v1127 = vpack.c.b16 %v1113, %v1112
    %v1128 = vpack.c.b16 %v1115, %v1114
    %v1129 = vpack.c.b16 %v1117, %v1116
    %v1130 = vpack.c.b16 %v1119, %v1118
    %v1131 = vpack.c.b16 %v1121, %v1120
    %v1132 = vpack.c.b16 %v1123, %v1122
    %v1133 = vpack.c.b16 %v1125, %v1124
    %1142 = vmatprep.subr.bf16.mxu0 0
    %1143 = vmatpush1.bf16.msra.mxu0 %v1126
    %1144 = vmatprep.subr.bf16.mxu0 0
    %1145 = vmatpush1.bf16.msra.mxu0 %v1127
    %1146 = vmatprep.subr.bf16.mxu0 0
    %1147 = vmatpush1.bf16.msra.mxu0 %v1128
    %1148 = vmatprep.subr.bf16.mxu0 0
    %1149 = vmatpush1.bf16.msra.mxu0 %v1129
    %1150 = vmatprep.subr.bf16.mxu0 0
    %1151 = vmatpush1.bf16.msra.mxu0 %v1130
    %1152 = vmatprep.subr.bf16.mxu0 0
    %1153 = vmatpush1.bf16.msra.mxu0 %v1131
    %1154 = vmatprep.subr.bf16.mxu0 0
    %1155 = vmatpush1.bf16.msra.mxu0 %v1132
    %1156 = vmatprep.subr.bf16.mxu0 0
    %1157 = vmatpush1.bf16.msra.mxu0 %v1133
    %1158 = vmatprep.subr.bf16.mxu0 0
    %1159 = vmatpush1.bf16.msra.mxu0 0
    %1160 = vmatprep.subr.bf16.mxu0 0
    %1161 = vmatpush1.bf16.msra.mxu0 0
    %1162 = vmatprep.subr.bf16.mxu0 0
    %1163 = vmatpush1.bf16.msra.mxu0 0
    %1164 = vmatprep.subr.bf16.mxu0 0
    %1165 = vmatpush1.bf16.msra.mxu0 0
    %1166 = vmatprep.subr.bf16.mxu0 0
    %1167 = vmatpush1.bf16.msra.mxu0 0
    %1168 = vmatprep.subr.bf16.mxu0 0
    %1169 = vmatpush1.bf16.msra.mxu0 0
    %1170 = vmatprep.subr.bf16.mxu0 0
    %1171 = vmatpush1.bf16.msra.mxu0 0
    %1172 = vmatprep.subr.bf16.mxu0 0
    %1173 = vmatpush1.bf16.msra.mxu0 0
    %1174 = vmatprep.mubr.bf16.mxu0 0
    %1175 = vmatmul.mubr.bf16.gmra.mrb[0].mxu0 %v1063
    %v1176 = vpop.f32.mrb[0].mxu0
    %v1177 = vadd.f32 %v1092, %v1176
    %v1178 = vpop.f32.mrb[0].mxu0
    %v1179 = vpop.f32.mrb[0].mxu0
    %v1180 = vadd.f32 %v1092, %v1179
    %v1181 = vpop.f32.mrb[0].mxu0
    %1182 = vmatprep.mubr.bf16.mxu0 0
    %1183 = vmatmul.mubr.bf16.gmra.mrb[0].mxu0 %v1064
    %v1184 = vpop.f32.mrb[0].mxu0
    %v1185 = vadd.f32 %v1092, %v1184
    %v1186 = vpop.f32.mrb[0].mxu0
    %v1187 = vpop.f32.mrb[0].mxu0
    %v1188 = vadd.f32 %v1092, %v1187
    %v1189 = vpop.f32.mrb[0].mxu0
    %1190 = vmatprep.mubr.bf16.mxu0 0
    %1191 = vmatmul.mubr.bf16.gmra.mrb[0].mxu0 %v1065
    %v1192 = vpop.f32.mrb[0].mxu0
    %v1193 = vadd.f32 %v1092, %v1192
    %v1194 = vpop.f32.mrb[0].mxu0
    %v1195 = vpop.f32.mrb[0].mxu0
    %v1196 = vadd.f32 %v1092, %v1195
    %v1197 = vpop.f32.mrb[0].mxu0
    %1198 = vmatprep.mubr.bf16.mxu0 0
    %1199 = vmatmul.mubr.bf16.gmra.mrb[0].mxu0 %v1066
    %v1200 = vpop.f32.mrb[0].mxu0
    %v1201 = vadd.f32 %v1092, %v1200
    %v1202 = vpop.f32.mrb[0].mxu0
    %v1203 = vpop.f32.mrb[0].mxu0
    %v1204 = vadd.f32 %v1092, %v1203
    %v1205 = vpop.f32.mrb[0].mxu0
    %1206 = vmatprep.mubr.bf16.mxu0 0
    %1207 = vmatmul.mubr.bf16.gmra.mrb[0].mxu0 %v1067
    %v1208 = vpop.f32.mrb[0].mxu0
    %v1209 = vadd.f32 %v1092, %v1208
    %v1210 = vpop.f32.mrb[0].mxu0
    %v1211 = vpop.f32.mrb[0].mxu0
    %v1212 = vadd.f32 %v1092, %v1211
    %v1213 = vpop.f32.mrb[0].mxu0
    %1214 = vmatprep.mubr.bf16.mxu0 0
    %1215 = vmatmul.mubr.bf16.gmra.mrb[0].mxu0 %v1068
    %v1216 = vpop.f32.mrb[0].mxu0
    %v1217 = vadd.f32 %v1092, %v1216
    %v1218 = vpop.f32.mrb[0].mxu0
    %v1219 = vpop.f32.mrb[0].mxu0
    %v1220 = vadd.f32 %v1092, %v1219
    %v1221 = vpop.f32.mrb[0].mxu0
    %1222 = vmatprep.mubr.bf16.mxu0 0
    %1223 = vmatmul.mubr.bf16.gmra.mrb[0].mxu0 %v1069
    %v1224 = vpop.f32.mrb[0].mxu0
    %v1225 = vadd.f32 %v1092, %v1224
    %v1226 = vpop.f32.mrb[0].mxu0
    %v1227 = vpop.f32.mrb[0].mxu0
    %v1228 = vadd.f32 %v1092, %v1227
    %v1229 = vpop.f32.mrb[0].mxu0
    %1230 = vmatprep.mubr.bf16.mxu0 0
    %1231 = vmatmul.mubr.bf16.gmra.mrb[0].mxu0 %v1070
    %v1232 = vpop.f32.mrb[0].mxu0
    %v1233 = vadd.f32 %v1092, %v1232
    %v1234 = vpop.f32.mrb[0].mxu0
    %v1235 = vpop.f32.mrb[0].mxu0
    %v1236 = vadd.f32 %v1092, %v1235
    %v1237 = vpop.f32.mrb[0].mxu0
    %1238 = vdwg.mxu0
    %1239 = vst [vmem:[#allocation17] sm:$0xff] %v1177
    %1240 = vst [vmem:[#allocation17 + $0x8] sm:$0xff] %v1180
    %1241 = vst [vmem:[#allocation17 + $0x10] sm:$0xff] %v1185
    %1242 = vst [vmem:[#allocation17 + $0x18] sm:$0xff] %v1188
    %1243 = vst [vmem:[#allocation17 + $0x20] sm:$0xff] %v1193
    %1244 = vst [vmem:[#allocation17 + $0x28] sm:$0xff] %v1196
    %1245 = vst [vmem:[#allocation17 + $0x30] sm:$0xff] %v1201
    %1246 = vst [vmem:[#allocation17 + $0x38] sm:$0xff] %v1204
    %1247 = vst [vmem:[#allocation17 + $0x40] sm:$0xff] %v1209
    %1248 = vst [vmem:[#allocation17 + $0x48] sm:$0xff] %v1212
    %1249 = vst [vmem:[#allocation17 + $0x50] sm:$0xff] %v1217
    %1250 = vst [vmem:[#allocation17 + $0x58] sm:$0xff] %v1220
    %1251 = vst [vmem:[#allocation17 + $0x60] sm:$0xff] %v1225
    %1252 = vst [vmem:[#allocation17 + $0x68] sm:$0xff] %v1228
    %1253 = vst [vmem:[#allocation17 + $0x70] sm:$0xff] %v1233
    %1254 = vst [vmem:[#allocation17 + $0x78] sm:$0xff] %v1236
    // Predicated region
    $region74: #{mlpnet_forward.1} parent=1 // pred_check
      _
    $region75: #{mlpnet_forward.1} parent=1 // pred_check_branch
      %1256 = sbr.rel (0) target = $region77
    $region76: #{mlpnet_forward.1} parent=1 // pred_region
      %s1258 = ssub.s32 2048, 2048
      %1259 = vsyncadd [#allocation4], %s1258
      %s1260 = sshll.u32 [#allocation17], 4
      %s1261 = int_to_ptr.vmem [resolvable:$true] %s1260
      %1266 = dma.vmem_to_hbm [thread:$0]  %s1261, 2048, %s9, [#allocation4], 128, 128, 8
    $region77: #{mlpnet_forward.1} parent=1 // pred_fallthru
      _
    // Predicated region
    $region78: #{mlpnet_forward.1} parent=1 // pred_check
      _
    $region79: #{mlpnet_forward.1} parent=1 // pred_check_branch
      %1268 = sbr.rel (0) target = $region81
    $region80: #{mlpnet_forward.1} parent=1 // pred_region
      %1269 = dma.done [#allocation4], 2048
    $region81: #{mlpnet_forward.1} parent=1 // pred_fallthru
      _
    %1270 = vsyncpa [#allocation3], 1
    %1271 = vsyncpa [#allocation6], 1
    %1272 = vsyncpa [#allocation9], 1
    %1273 = vsyncpa [#allocation12], 1
    %1274 = vsyncpa [#allocation15], 1
    %1275 = vsyncpa [#allocation4], 1

</llo_original>
